<compile_context>
chip_gen: v6e
topology: v6e:2x2x1
jax: 0.10.0
libtpu: 0.0.40
codegen_flags: <defaults>
</compile_context>

<pallas_src>
import math

import jax
import jax.numpy as jnp
from jax.experimental import pallas as pl
from jax.experimental.pallas import tpu as pltpu

LANE = 128
# ~4 MiB per block: amortizes the ~0.35 us per-grid-step overhead against
# v7x's 3.2 TB/s HBM; double-buffered in + out (~4x block) + bias fits every
# generation's scoped VMEM at the 32 MiB limit below.
TARGET_BLOCK_BYTES = 4 * 1024 * 1024
VMEM_LIMIT_BYTES = 32 * 1024 * 1024  # safe on v5e/v6e (128 MiB) and v7x (64 MiB)


def _round_up(x: int, m: int) -> int:
    return ((x + m - 1) // m) * m


def _round_down(x: int, m: int) -> int:
    return (x // m) * m


def _lcm(a: int, b: int) -> int:
    return a * b // math.gcd(a, b)


def _add_bias_kernel(x_ref, b_ref, o_ref):
    # x_ref: (tm, tn); b_ref: (1, tn) (sublane-broadcast) or (tm, tn) (exact).
    # Plain VPU add; memory-bound, so the add hides under the DMA stream.
    o_ref[...] = x_ref[...] + b_ref[...]


def bitfit_add_bias(hidden_state: jax.Array, bias: jax.Array) -> jax.Array:
    """hidden_state: (..., dim); bias: (dim,). Returns hidden_state + bias."""
    orig_shape = hidden_state.shape
    dim = orig_shape[-1]
    assert bias.shape == (dim,)

    dtype = hidden_state.dtype
    itemsize = jnp.dtype(dtype).itemsize
    # Sublane packing of a vreg: f32 -> 8, bf16/f16 -> 16, int8/fp8 -> 32.
    pack = max(8, 32 // itemsize)

    x2d = hidden_state.reshape(-1, dim)
    rows = x2d.shape[0]
    d_eff = dim
    period = 1       # bias repeat period (in folded rows) on the folded path
    folded = False

    # Lane-dense fold for narrow dims: put 128 elements on the lane axis so
    # output stores are unmasked.  Generalized: works for any dim < 128 as
    # long as the flattened element count is a multiple of 128.
    if dim < LANE and (rows * dim) % LANE == 0:
        folded = True
        period = _lcm(dim, LANE) // LANE
        d_eff = LANE
        x2d = x2d.reshape(-1, LANE)
        rows = x2d.shape[0]

    # Lane tile: keep the full dim in the block when a minimal-height block
    # fits the budget; otherwise (very wide, 128-aligned dims) tile lanes.
    if d_eff % LANE == 0 and pack * d_eff * itemsize > TARGET_BLOCK_BYTES:
        tn = max(LANE, _round_down(TARGET_BLOCK_BYTES // (pack * itemsize), LANE))
    else:
        tn = d_eff

    # Row tile: fill the per-block budget, rounded to a multiple of both the
    # sublane pack and the bias repeat period (so every block start is
    # period-aligned on the folded path).
    unit = _lcm(pack, period)
    tm = max(unit, _round_down(TARGET_BLOCK_BYTES // (tn * itemsize), unit))
    if rows >= 2 * unit:
        # v7x megacore: guarantee >= 2 row blocks so both TensorCores stream.
        tm = min(tm, _round_up(pl.cdiv(rows, 2), unit))
    else:
        # Tiny input: one block equal to the full row extent (always legal).
        tm = min(tm, rows)

    # Bias operand layout.
    if folded:
        if period == 1:
            # 128 % dim == 0: every folded row sees the same bias pattern.
            b_arr = jnp.tile(bias, LANE // dim).reshape(1, LANE)
        else:
            # General lcm fold: pattern repeats every `period` rows; tm is a
            # multiple of `period` (or equals the full row count), so one
            # pre-tiled (tm, 128) block is correct for every grid step and is
            # DMA'd once (constant block index).
            reps = (tm * LANE) // dim
            b_arr = jnp.tile(bias, reps).reshape(tm, LANE)
    else:
        b_arr = bias.reshape(1, dim)
    b_block = (b_arr.shape[0], tn)

    cost = pl.CostEstimate(
        flops=rows * d_eff,
        transcendentals=0,
        bytes_accessed=2 * rows * d_eff * itemsize + b_arr.size * itemsize,
    )

    if tn < d_eff:
        # Very-wide-dim fallback: dim-tile index on the OUTER grid axis so the
        # bias block index is constant across the inner row loop.
        grid = (pl.cdiv(d_eff, tn), pl.cdiv(rows, tm))
        in_specs = [
            pl.BlockSpec((tm, tn), lambda j, i: (i, j)),
            pl.BlockSpec(b_block, lambda j, i: (0, j)),
        ]
        out_specs = pl.BlockSpec((tm, tn), lambda j, i: (i, j))
        dim_sem = ("parallel", "parallel")
    else:
        # Common path: full dim per block, 1-D row grid, bias resident.
        grid = (pl.cdiv(rows, tm),)
        in_specs = [
            pl.BlockSpec((tm, tn), lambda i: (i, 0)),
            pl.BlockSpec(b_block, lambda i: (0, 0)),
        ]
        out_specs = pl.BlockSpec((tm, tn), lambda i: (i, 0))
        dim_sem = ("parallel",)

    # NOTE: no input_output_aliases here — with a live (non-donated) input XLA
    # inserts a defensive copy that adds ~50% HBM traffic.  Donate at a jit
    # boundary if in-place update is desired.
    out = pl.pallas_call(
        _add_bias_kernel,
        out_shape=jax.ShapeDtypeStruct((rows, d_eff), dtype),
        grid=grid,
        in_specs=in_specs,
        out_specs=out_specs,
        cost_estimate=cost,
        compiler_params=pltpu.CompilerParams(
            dimension_semantics=dim_sem,
            vmem_limit_bytes=VMEM_LIMIT_BYTES,
        ),
    )(x2d, b_arr)

    return out.reshape(orig_shape)


if __name__ == "__main__":
    dtype = jnp.bfloat16  # torch.float16 analogue on TPU
    key = jax.random.PRNGKey(0)
    k_x, k_b, k_x2, k_b2 = jax.random.split(key, 4)

    # Case 1: module-sized example (batch=2, seq=8, dim=32) — exercises the
    # power-of-two lane fold (period == 1).
    batch, seq, dim = 2, 8, 32
    hidden_state = jax.random.normal(
        k_x, (batch, seq, dim), dtype=jnp.float32).astype(dtype)
    # Module inits bias to zeros; use a nonzero bias so the add is exercised.
    bias = (jax.random.normal(k_b, (dim,), dtype=jnp.float32) * 0.1).astype(dtype)

    ref = hidden_state.astype(jnp.float32) + bias.astype(jnp.float32)
    out = jax.block_until_ready(bitfit_add_bias(hidden_state, bias))
    assert out.shape == hidden_state.shape and out.dtype == dtype
    assert jnp.allclose(out.astype(jnp.float32), ref, atol=1e-2, rtol=1e-2)

    # Case 2: odd narrow dim (dim=96) — exercises the generalized lcm fold.
    dim2 = 96
    hs2 = jax.random.normal(
        k_x2, (batch, seq, dim2), dtype=jnp.float32).astype(dtype)
    b2 = (jax.random.normal(k_b2, (dim2,), dtype=jnp.float32) * 0.1).astype(dtype)
    ref2 = hs2.astype(jnp.float32) + b2.astype(jnp.float32)
    out2 = jax.block_until_ready(bitfit_add_bias(hs2, b2))
    assert out2.shape == hs2.shape and out2.dtype == dtype
    assert jnp.allclose(out2.astype(jnp.float32), ref2, atol=1e-2, rtol=1e-2)

    print("KERNEL_OK")
</pallas_src>

<mosaic_0001>
module attributes {stable_mosaic.version = 11 : i64} {
  func.func @_add_bias_kernel(%arg0: i32, %arg1: memref<4x128xbf16, #tpu.memory_space<vmem>>, %arg2: memref<1x128xbf16, #tpu.memory_space<vmem>>, %arg3: memref<4x128xbf16, #tpu.memory_space<vmem>>) attributes {dimension_semantics = [#tpu.dimension_semantics<parallel>], iteration_bounds = array<i64: 1>, scalar_prefetch = 0 : i64, scratch_operands = 0 : i64, tpu.core_type = #tpu.core_type<tc>, window_params = [{transform_indices = @transform_0, window_bounds = array<i64: 4, 128>}, {pipeline_mode = #tpu.pipeline_mode<synchronous>, transform_indices = @transform_1, window_bounds = array<i64: 1, 128>}, {transform_indices = @transform_2, window_bounds = array<i64: 4, 128>}]} {
    %c0 = arith.constant 0 : index
    %c0_0 = arith.constant 0 : index
    %0 = vector.load %arg1[%c0, %c0_0] : memref<4x128xbf16, #tpu.memory_space<vmem>>, vector<4x128xbf16>
    %c0_1 = arith.constant 0 : index
    %c0_2 = arith.constant 0 : index
    %1 = vector.load %arg2[%c0_1, %c0_2] : memref<1x128xbf16, #tpu.memory_space<vmem>>, vector<1x128xbf16>
    %2 = vector.broadcast %1 : vector<1x128xbf16> to vector<4x128xbf16>
    %3 = arith.addf %0, %2 : vector<4x128xbf16>
    %c0_3 = arith.constant 0 : index
    %c0_4 = arith.constant 0 : index
    %4 = vector.load %arg3[%c0_3, %c0_4] : memref<4x128xbf16, #tpu.memory_space<vmem>>, vector<4x128xbf16>
    tpu.vector_store %arg3[%c0_3, %c0_4], %3 {strides = array<i32>} : memref<4x128xbf16, #tpu.memory_space<vmem>>, vector<4x128xbf16>,
    return
  }
  func.func @transform_0(%arg0: i32) -> (i32, i32) {
    %c0_i32 = arith.constant 0 : i32
    %c0_i32_0 = arith.constant 0 : i32
    return %arg0, %c0_i32 : i32, i32
  }
  func.func @transform_1(%arg0: i32) -> (i32, i32) {
    %c0_i32 = arith.constant 0 : i32
    %c0_i32_0 = arith.constant 0 : i32
    %c0_i32_1 = arith.constant 0 : i32
    return %c0_i32, %c0_i32_0 : i32, i32
  }
  func.func @transform_2(%arg0: i32) -> (i32, i32) {
    %c0_i32 = arith.constant 0 : i32
    %c0_i32_0 = arith.constant 0 : i32
    return %arg0, %c0_i32 : i32, i32
  }
}

</mosaic_0001>

<llo_original>
// kernel: tpu_custom_call.1
$region0: #{tpu_custom_call.1}
  #allocation0 [shape = 'u32[]', space=smem, size = 0x4, offset = 0x4, fixed_abs, tag = 'smem constant byte address 0x4 - core index']
  #allocation1 [shape = 'u32[144,128]{1,0:T(1,128)}', space=vmem, size = 0x12000, scoped, tag = 'internal scratch']
  %s0 = inlined_call_operand.hbm [shape: bf16[4,128], index: 0, kind: input, shape index: {}]
  %s1 = inlined_call_operand.vmem [shape: bf16[1,128], index: 1, kind: input, shape index: {}]
  %s2 = inlined_call_operand.hbm [shape: bf16[4,128], index: 2, kind: output, shape index: {}]
  %s3 = sld [smem:[#allocation0]]
  $region22: #{tpu_custom_call.1} parent=0
    _
  %s5 = ssub.s32 1, %s3
  %s6 = scalar_select 0, %s5, %s3
  $region1: #{tpu_custom_call.1} parent=0
    #allocation2 [shape = 'u8[1024]{0}', space=vmem, size = 0x400, scoped, tag = 'input window, operand 0, single buffered']
    #allocation3 [shape = 's32[1]{0}', space=sflag, size = 0x4, scoped, tag = 'scoped memory for tpu_custom_call.1']
    #allocation4 [shape = 's32[1]{0}', space=sflag, size = 0x4, scoped, tag = 'scoped memory for tpu_custom_call.1']
    #allocation5 [shape = 'u8[1024]{0}', space=vmem, size = 0x400, scoped, tag = 'output window, operand 0, single buffered']
    %7 = vsyncpa [#allocation3], 0
    %8 = vsyncpa [#allocation4], 0
    // Predicated region
    $region2: #{tpu_custom_call.1} parent=1 // pred_check
      _
    $region3: #{tpu_custom_call.1} parent=1 // pred_check_branch
      %10 = sbr.rel (0) target = $region5
    $region4: #{tpu_custom_call.1} parent=1 // pred_region
      %s12 = ssub.s32 32, 32
      %13 = vsyncadd [#allocation3], %s12
      %s15 = sshll.u32 [#allocation2], 4
      %s16 = int_to_ptr.vmem [resolvable:$true] %s15
      %18 = dma.hbm_to_vmem [thread:$0]  %s0, 32, %s16, [#allocation3]
    $region5: #{tpu_custom_call.1} parent=1 // pred_fallthru
      _
    // Predicated region
    $region6: #{tpu_custom_call.1} parent=1 // pred_check
      _
    $region7: #{tpu_custom_call.1} parent=1 // pred_check_branch
      %20 = sbr.rel (0) target = $region9
    $region8: #{tpu_custom_call.1} parent=1 // pred_region
      _
    $region9: #{tpu_custom_call.1} parent=1 // pred_fallthru
      _
    // Predicated region
    $region10: #{tpu_custom_call.1} parent=1 // pred_check
      _
    $region11: #{tpu_custom_call.1} parent=1 // pred_check_branch
      %22 = sbr.rel (0) target = $region13
    $region12: #{tpu_custom_call.1} parent=1 // pred_region
      %23 = dma.done [#allocation3], 32
    $region13: #{tpu_custom_call.1} parent=1 // pred_fallthru
      _
    %v24 = vld [vmem:[#allocation2] sm:$0x3]
    %v25 = vld [vmem:[%s1] sm:$0x1]
    %v27 = vpack.i.b16 %v25, %v25
    %v29 = vlaneseq
    %v30 = vshrl.u32 %v29, 7
    %v31 = vsub.s32 0, %v30
    %v32 = vrot.slane %v27, %v31
    %v33 = vadd.bf16 %v24, %v32
    %34 = vst [vmem:[#allocation5] sm:$0x3] %v33
    // Predicated region
    $region14: #{tpu_custom_call.1} parent=1 // pred_check
      _
    $region15: #{tpu_custom_call.1} parent=1 // pred_check_branch
      %36 = sbr.rel (0) target = $region17
    $region16: #{tpu_custom_call.1} parent=1 // pred_region
      %s38 = ssub.s32 32, 32
      %39 = vsyncadd [#allocation4], %s38
      %s41 = sshll.u32 [#allocation5], 4
      %s42 = int_to_ptr.vmem [resolvable:$true] %s41
      %44 = dma.vmem_to_hbm [thread:$0]  %s42, 32, %s2, [#allocation4]
    $region17: #{tpu_custom_call.1} parent=1 // pred_fallthru
      _
    // Predicated region
    $region18: #{tpu_custom_call.1} parent=1 // pred_check
      _
    $region19: #{tpu_custom_call.1} parent=1 // pred_check_branch
      %46 = sbr.rel (0) target = $region21
    $region20: #{tpu_custom_call.1} parent=1 // pred_region
      %47 = dma.done [#allocation4], 32
    $region21: #{tpu_custom_call.1} parent=1 // pred_fallthru
      _
    %48 = vsyncpa [#allocation3], 1
    %49 = vsyncpa [#allocation4], 1

</llo_original>
